<compile_context>
chip_gen: v7x
topology: tpu7x:2x2x1
jax: 0.10.0
libtpu: 0.0.40
codegen_flags: <defaults>
</compile_context>

<pallas_src>
import functools

import jax
import jax.numpy as jnp
from jax.experimental import pallas as pl
from jax.experimental.pallas import tpu as pltpu

LANE = 128
_VMEM_BUDGET = 28 * 1024 * 1024   # target for the double-buffered working set
_VMEM_LIMIT = 40 * 1024 * 1024    # scoped VMEM limit (fits v5e/v6e/v7x)


def _masked_sqsum_kernel(pred_ref, targ_ref, mask_ref, o_ref, *,
                         rows_total, tile_r):
    i = pl.program_id(1)

    m = mask_ref[0]                              # (Cm, tr, L), 1 byte/elem
    if m.dtype == jnp.bool_:
        valid = jnp.logical_not(m)               # keep where mask is False
    else:
        valid = m == 0

    # Ragged last row-tile: mask rows past the true extent (static branch —
    # only generated when the tile does not evenly divide the row count).
    if rows_total % tile_r != 0:
        row = i * tile_r + jax.lax.broadcasted_iota(jnp.int32, valid.shape, 1)
        valid = jnp.logical_and(valid, row < rows_total)

    d = targ_ref[0].astype(jnp.float32) - pred_ref[0].astype(jnp.float32)
    # jnp.where (select), not multiply, so garbage in OOB rows (possibly
    # Inf/NaN) cannot propagate into the sum.
    sq = jnp.where(valid, d * d, 0.0)            # (C, tr, L); mask broadcasts
    plane = jnp.sum(sq, axis=0)                  # (tr, L): VPU plane adds

    tr, ln = plane.shape
    p_rows = o_ref.shape[2]
    if p_rows == 8:
        # Leading-axis fold -> pure vreg-wise VPU adds (no XLU), one store.
        o_ref[0, 0] = jnp.sum(plane.reshape(tr // 8, 8, ln), axis=0)
    else:
        # Tiny-tile fallback (tr not a multiple of 8).
        o_ref[0, 0] = jnp.sum(plane, axis=0, keepdims=True)


@functools.partial(jax.jit, static_argnames=("tile_rows",))
def masked_mse_loss(pred, target, sky_mask, *, tile_rows=2048):
    assert pred.ndim == target.ndim == 4, "inconsistent dimensions"
    assert pred.shape == target.shape, "inconsistent dimensions"
    assert sky_mask.ndim == 4
    B, C, H, W = pred.shape
    Bm, Cm, Hm, Wm = sky_mask.shape
    assert (Bm, Hm, Wm) == (B, H, W)
    assert Cm in (1, C), "mask channels must be 1 or match pred"

    # Keep the mask at 1 byte/elem; bool / int8 pass straight through
    # (no extra XLA astype copy pass over HBM).
    mask1 = sky_mask if sky_mask.dtype.itemsize == 1 else (sky_mask != 0)

    HW = H * W
    if HW % LANE == 0:
        R, L = HW // LANE, LANE      # lane-dense view: free reshape of NCHW
    else:
        R, L = H, W                  # natural layout fallback (pad-free)

    pred_v = pred.reshape(B, C, R, L)
    targ_v = target.reshape(B, C, R, L)
    mask_v = mask1.reshape(B, Cm, R, L)

    # Tile rows: as large as the VMEM budget allows (double-buffered pred,
    # target and mask blocks), multiple of 32 (legal for f32/bf16/int8/bool),
    # or the full row extent when that is smaller.
    per_row = L * 2 * (C * (pred.dtype.itemsize + target.dtype.itemsize)
                       + Cm * mask_v.dtype.itemsize)
    tr = min(int(tile_rows), max(32, _VMEM_BUDGET // per_row))
    tr = max(32, (tr // 32) * 32)
    if R <= tr:
        tr = R                        # "equal to full dim" is always legal
    n_tiles = pl.cdiv(R, tr)
    p_rows = 8 if tr % 8 == 0 else 1  # rows of the lane-dense partial output

    kernel = functools.partial(_masked_sqsum_kernel, rows_total=R, tile_r=tr)

    partials = pl.pallas_call(
        kernel,
        out_shape=jax.ShapeDtypeStruct((B, n_tiles, p_rows, L), jnp.float32),
        grid=(B, n_tiles),
        in_specs=[
            pl.BlockSpec((1, C, tr, L), lambda b, i: (b, 0, i, 0)),
            pl.BlockSpec((1, C, tr, L), lambda b, i: (b, 0, i, 0)),
            pl.BlockSpec((1, Cm, tr, L), lambda b, i: (b, 0, i, 0)),
        ],
        out_specs=pl.BlockSpec((1, 1, p_rows, L), lambda b, i: (b, i, 0, 0)),
        compiler_params=pltpu.CompilerParams(
            # No cross-grid carry -> both axes parallel (v7x dual-TC sharding).
            dimension_semantics=("parallel", "parallel"),
            vmem_limit_bytes=_VMEM_LIMIT),
    )(pred_v, targ_v, mask_v)

    # Numerator: tiny XLA reduce over the lane-dense per-tile partial sums.
    sq_sum = jnp.sum(partials)
    # Denominator: count of kept elements (tiny reduce over the 1-byte mask),
    # replicated across pred channels when the mask is single-channel.
    mult = C if Cm == 1 else 1
    valid_cnt = (Bm * Cm * Hm * Wm - jnp.count_nonzero(mask1)) * mult
    # NOTE: count == 0 (all sky) yields NaN, matching torch's mean() over an
    # empty selection. f32 sums match torch's f32 mean accuracy (~1e-7 rel
    # rounding beyond ~16.7M valid elements).
    return sq_sum / valid_cnt.astype(jnp.float32)


def masked_mse_loss_ref(pred, target, sky_mask):
    if sky_mask.shape[1] == 1 and pred.shape[1] != 1:
        sky_mask = jnp.broadcast_to(sky_mask, pred.shape)
    valid = ~sky_mask.astype(bool)
    d = jnp.where(valid, target.astype(jnp.float32) - pred.astype(jnp.float32),
                  0.0)
    return jnp.sum(d * d) / jnp.sum(valid.astype(jnp.float32))


if __name__ == "__main__":
    key = jax.random.PRNGKey(0)
    k1, k2, k3 = jax.random.split(key, 3)

    B, C, H, W = 2, 3, 16, 16
    pred = jax.random.normal(k1, (B, C, H, W), dtype=jnp.float32)
    target = jax.random.normal(k2, (B, C, H, W), dtype=jnp.float32)
    sky_mask = jax.random.bernoulli(k3, p=0.3, shape=(B, 1, H, W))  # bool

    loss = jax.block_until_ready(masked_mse_loss(pred, target, sky_mask))

    ref = masked_mse_loss_ref(pred, target, sky_mask)
    assert jnp.allclose(loss, ref, rtol=1e-5, atol=1e-6), (loss, ref)

    print("KERNEL_OK")
</pallas_src>

<mosaic_0001>
module attributes {stable_mosaic.version = 11 : i64} {
  func.func @_masked_sqsum_kernel(%arg0: i32, %arg1: i32, %arg2: memref<1x3x2x128xf32, #tpu.memory_space<vmem>>, %arg3: memref<1x3x2x128xf32, #tpu.memory_space<vmem>>, %arg4: memref<1x1x2x128xi32, #tpu.memory_space<vmem>>, %arg5: memref<1x1x1x128xf32, #tpu.memory_space<vmem>>) attributes {dimension_semantics = [#tpu.dimension_semantics<parallel>, #tpu.dimension_semantics<parallel>], iteration_bounds = array<i64: 2, 1>, scalar_prefetch = 0 : i64, scratch_operands = 0 : i64, tpu.core_type = #tpu.core_type<tc>, window_params = [{transform_indices = @transform_0, window_bounds = array<i64: 1, 3, 2, 128>}, {transform_indices = @transform_1, window_bounds = array<i64: 1, 3, 2, 128>}, {transform_indices = @transform_2, window_bounds = array<i64: 1, 1, 2, 128>}, {transform_indices = @transform_3, window_bounds = array<i64: 1, 1, 1, 128>}]} {
    %c0 = arith.constant 0 : index
    %c0_0 = arith.constant 0 : index
    %c0_1 = arith.constant 0 : index
    %c0_2 = arith.constant 0 : index
    %0 = vector.load %arg4[%c0, %c0_0, %c0_1, %c0_2] : memref<1x1x2x128xi32, #tpu.memory_space<vmem>>, vector<1x1x2x128xi32>
    %1 = vector.shape_cast %0 : vector<1x1x2x128xi32> to vector<1x2x128xi32>
    %cst = arith.constant dense<0> : vector<1x2x128xi32>
    %2 = arith.cmpi ne, %1, %cst : vector<1x2x128xi32>
    %cst_3 = arith.constant dense<true> : vector<1x2x128xi1>
    %3 = arith.xori %2, %cst_3 : vector<1x2x128xi1>
    %c0_4 = arith.constant 0 : index
    %c0_5 = arith.constant 0 : index
    %c0_6 = arith.constant 0 : index
    %c0_7 = arith.constant 0 : index
    %4 = vector.load %arg3[%c0_4, %c0_5, %c0_6, %c0_7] : memref<1x3x2x128xf32, #tpu.memory_space<vmem>>, vector<1x3x2x128xf32>
    %5 = vector.shape_cast %4 : vector<1x3x2x128xf32> to vector<3x2x128xf32>
    %c0_8 = arith.constant 0 : index
    %c0_9 = arith.constant 0 : index
    %c0_10 = arith.constant 0 : index
    %c0_11 = arith.constant 0 : index
    %6 = vector.load %arg2[%c0_8, %c0_9, %c0_10, %c0_11] : memref<1x3x2x128xf32, #tpu.memory_space<vmem>>, vector<1x3x2x128xf32>
    %7 = vector.shape_cast %6 : vector<1x3x2x128xf32> to vector<3x2x128xf32>
    %8 = arith.subf %5, %7 : vector<3x2x128xf32>
    %9 = arith.mulf %8, %8 : vector<3x2x128xf32>
    %cst_12 = arith.constant 0.000000e+00 : f32
    %10 = vector.shape_cast %3 : vector<1x2x128xi1> to vector<1x2x128xi1>
    %11 = vector.broadcast %10 : vector<1x2x128xi1> to vector<3x2x128xi1>
    %12 = vector.broadcast %cst_12 : f32 to vector<3x2x128xf32>
    %13 = arith.select %11, %9, %12 : vector<3x2x128xi1>, vector<3x2x128xf32>
    %cst_13 = arith.constant dense<0.000000e+00> : vector<2x128xf32>
    %14 = vector.multi_reduction <add>, %13, %cst_13 [0] : vector<3x2x128xf32> to vector<2x128xf32>
    %cst_14 = arith.constant dense<0.000000e+00> : vector<128xf32>
    %15 = vector.multi_reduction <add>, %14, %cst_14 [0] : vector<2x128xf32> to vector<128xf32>
    %16 = vector.shape_cast %15 : vector<128xf32> to vector<1x128xf32>
    %c0_15 = arith.constant 0 : index
    %c0_16 = arith.constant 0 : index
    %c0_17 = arith.constant 0 : index
    %c0_18 = arith.constant 0 : index
    %17 = vector.load %arg5[%c0_15, %c0_16, %c0_17, %c0_18] : memref<1x1x1x128xf32, #tpu.memory_space<vmem>>, vector<1x1x1x128xf32>
    %18 = vector.shape_cast %17 : vector<1x1x1x128xf32> to vector<1x128xf32>
    %19 = vector.shape_cast %16 : vector<1x128xf32> to vector<1x1x1x128xf32>
    tpu.vector_store %arg5[%c0_15, %c0_16, %c0_17, %c0_18], %19 {strides = array<i32>} : memref<1x1x1x128xf32, #tpu.memory_space<vmem>>, vector<1x1x1x128xf32>,
    return
  }
  func.func @transform_0(%arg0: i32, %arg1: i32) -> (i32, i32, i32, i32) {
    %c0_i32 = arith.constant 0 : i32
    %c0_i32_0 = arith.constant 0 : i32
    %c0_i32_1 = arith.constant 0 : i32
    return %arg0, %c0_i32, %arg1, %c0_i32_0 : i32, i32, i32, i32
  }
  func.func @transform_1(%arg0: i32, %arg1: i32) -> (i32, i32, i32, i32) {
    %c0_i32 = arith.constant 0 : i32
    %c0_i32_0 = arith.constant 0 : i32
    %c0_i32_1 = arith.constant 0 : i32
    return %arg0, %c0_i32, %arg1, %c0_i32_0 : i32, i32, i32, i32
  }
  func.func @transform_2(%arg0: i32, %arg1: i32) -> (i32, i32, i32, i32) {
    %c0_i32 = arith.constant 0 : i32
    %c0_i32_0 = arith.constant 0 : i32
    %c0_i32_1 = arith.constant 0 : i32
    return %arg0, %c0_i32, %arg1, %c0_i32_0 : i32, i32, i32, i32
  }
  func.func @transform_3(%arg0: i32, %arg1: i32) -> (i32, i32, i32, i32) {
    %c0_i32 = arith.constant 0 : i32
    %c0_i32_0 = arith.constant 0 : i32
    %c0_i32_1 = arith.constant 0 : i32
    return %arg0, %arg1, %c0_i32, %c0_i32_0 : i32, i32, i32, i32
  }
}

</mosaic_0001>

<llo_original>
// kernel: masked_mse_loss.1
$region0: #{masked_mse_loss.1}
  #allocation0 [shape = 'u32[]', space=smem, size = 0x4, offset = 0x4, fixed_abs, tag = 'smem constant byte address 0x4 - core index']
  #allocation1 [shape = 'u32[144,128]{1,0:T(1,128)}', space=vmem, size = 0x12000, scoped, tag = 'internal scratch']
  %s0 = inlined_call_operand.vmem [shape: f32[2,3,2,128], index: 0, kind: input, shape index: {}]
  %s1 = inlined_call_operand.vmem [shape: f32[2,3,2,128], index: 1, kind: input, shape index: {}]
  %s2 = inlined_call_operand.vmem [shape: s32[2,1,2,128], index: 2, kind: input, shape index: {}]
  %s3 = inlined_call_operand.vmem [shape: f32[2,1,1,128], index: 3, kind: output, shape index: {}]
  %s4 = sld [smem:[#allocation0]]
  $region45: #{masked_mse_loss.1} parent=0
    _
  %s6 = ssub.s32 1, %s4
  %s7 = scalar_select 0, %s6, %s4
  loop: start=0, step=1, limit=4
  $region2: #{masked_mse_loss.1} parent=0 // loop_pre_header
    _
  $region3: #{masked_mse_loss.1} parent=0 // loop_header
    %s9 = sphi 0, %s13
    %p10 = scmp.ge.s32.totalorder %s9, 4
    %s16 = sphi 0, %s28
    %s17 = sphi 0, %s24
    %s18 = sphi 0, %s16
    %s19 = sphi 0, %s17
    %s20 = sphi 0, %s18
    %s21 = sphi 0, %s19
    %s33 = sphi 0, %s35
    %s36 = sphi 0, %s33
    %s37 = sphi 0, %s36
    %s53 = sphi 0, %s37
    %s61 = sphi 0, %s63
    %s64 = sphi 0, %s61
    %s65 = sphi 0, %s64
    %s81 = sphi 0, %s65
    %s89 = sphi 0, %s91
    %s92 = sphi 0, %s89
    %s93 = sphi 0, %s92
    %s109 = sphi 0, %s93
    %s117 = sphi 0, %s119
    %s120 = sphi 0, %s117
    %s121 = sphi 0, %s120
    %s137 = sphi 0, %s121
  $region4: #{masked_mse_loss.1} parent=0 // loop_header_branch
    %12 = sbr.rel (%p10) target = $region8
  $region5: #{masked_mse_loss.1} parent=0 // loop_body
    %s14 = ssub.s32 %s9, 1
    %s15 = ssub.s32 %s9, 2
    %s22 = sadd.s32 1, %s17
    %p23 = scmp.ge.s32.totalorder %s22, 1
    %s24 = scalar_select %p23, 0, %s22
    %s25 = sadd.s32 1, %s16
    %s26 = scalar_select %p23, %s25, %s16
    %p27 = scmp.ge.s32.totalorder %s26, 2
    %s28 = scalar_select %p27, 0, %s26
    %s29 = ssub.s32 %s16, %s28
    %s30 = ssub.s32 %s17, %s24
    %s31 = sor.u32 %s29, %s30
    %p32 = scmp.eq.s32.totalorder %s31, 0
    %s34 = sadd.s32 %s33, 1
    %s35 = scalar_select %p32, %s33, %s34
    %p38 = pneg %p32
    %p39 = scmp.eq.s32.totalorder %s9, 1
    %p40 = por %p38, %p39
    %p41 = scmp.ne.s32.totalorder %s33, %s36
    %p42 = scmp.eq.s32.totalorder %s9, 0
    %p43 = por %p41, %p42
    %p44 = scmp.ne.s32.totalorder %s33, %s36
    %p45 = scmp.eq.s32.totalorder %s14, 1
    %p46 = por %p44, %p45
    %p47 = scmp.ne.s32.totalorder %s36, %s37
    %p48 = scmp.eq.s32.totalorder %s14, 0
    %p49 = por %p47, %p48
    %p50 = scmp.ne.s32.totalorder %s36, %s37
    %p51 = scmp.eq.s32.totalorder %s15, 1
    %p52 = por %p50, %p51
    %p54 = scmp.ne.s32.totalorder %s37, %s53
    %p55 = scmp.eq.s32.totalorder %s15, 0
    %p56 = por %p54, %p55
    %s57 = ssub.s32 %s16, %s28
    %s58 = ssub.s32 %s17, %s24
    %s59 = sor.u32 %s57, %s58
    %p60 = scmp.eq.s32.totalorder %s59, 0
    %s62 = sadd.s32 %s61, 1
    %s63 = scalar_select %p60, %s61, %s62
    %p66 = pneg %p60
    %p67 = scmp.eq.s32.totalorder %s9, 1
    %p68 = por %p66, %p67
    %p69 = scmp.ne.s32.totalorder %s61, %s64
    %p70 = scmp.eq.s32.totalorder %s9, 0
    %p71 = por %p69, %p70
    %p72 = scmp.ne.s32.totalorder %s61, %s64
    %p73 = scmp.eq.s32.totalorder %s14, 1
    %p74 = por %p72, %p73
    %p75 = scmp.ne.s32.totalorder %s64, %s65
    %p76 = scmp.eq.s32.totalorder %s14, 0
    %p77 = por %p75, %p76
    %p78 = scmp.ne.s32.totalorder %s64, %s65
    %p79 = scmp.eq.s32.totalorder %s15, 1
    %p80 = por %p78, %p79
    %p82 = scmp.ne.s32.totalorder %s65, %s81
    %p83 = scmp.eq.s32.totalorder %s15, 0
    %p84 = por %p82, %p83
    %s85 = ssub.s32 %s16, %s28
    %s86 = ssub.s32 %s17, %s24
    %s87 = sor.u32 %s85, %s86
    %p88 = scmp.eq.s32.totalorder %s87, 0
    %s90 = sadd.s32 %s89, 1
    %s91 = scalar_select %p88, %s89, %s90
    %p94 = pneg %p88
    %p95 = scmp.eq.s32.totalorder %s9, 1
    %p96 = por %p94, %p95
    %p97 = scmp.ne.s32.totalorder %s89, %s92
    %p98 = scmp.eq.s32.totalorder %s9, 0
    %p99 = por %p97, %p98
    %p100 = scmp.ne.s32.totalorder %s89, %s92
    %p101 = scmp.eq.s32.totalorder %s14, 1
    %p102 = por %p100, %p101
    %p103 = scmp.ne.s32.totalorder %s92, %s93
    %p104 = scmp.eq.s32.totalorder %s14, 0
    %p105 = por %p103, %p104
    %p106 = scmp.ne.s32.totalorder %s92, %s93
    %p107 = scmp.eq.s32.totalorder %s15, 1
    %p108 = por %p106, %p107
    %p110 = scmp.ne.s32.totalorder %s93, %s109
    %p111 = scmp.eq.s32.totalorder %s15, 0
    %p112 = por %p110, %p111
    %s113 = ssub.s32 %s16, %s28
    %s114 = ssub.s32 %s17, %s24
    %s115 = sor.u32 %s113, %s114
    %p116 = scmp.eq.s32.totalorder %s115, 0
    %s118 = sadd.s32 %s117, 1
    %s119 = scalar_select %p116, %s117, %s118
    %p122 = pneg %p116
    %p123 = scmp.eq.s32.totalorder %s9, 1
    %p124 = por %p122, %p123
    %p125 = scmp.ne.s32.totalorder %s117, %s120
    %p126 = scmp.eq.s32.totalorder %s9, 0
    %p127 = por %p125, %p126
    %p128 = scmp.ne.s32.totalorder %s117, %s120
    %p129 = scmp.eq.s32.totalorder %s14, 1
    %p130 = por %p128, %p129
    %p131 = scmp.ne.s32.totalorder %s120, %s121
    %p132 = scmp.eq.s32.totalorder %s14, 0
    %p133 = por %p131, %p132
    %p134 = scmp.ne.s32.totalorder %s120, %s121
    %p135 = scmp.eq.s32.totalorder %s15, 1
    %p136 = por %p134, %p135
    %p138 = scmp.ne.s32.totalorder %s121, %s137
    %p139 = scmp.eq.s32.totalorder %s15, 0
    %p140 = por %p138, %p139
    %p141 = scmp.le.s32.totalorder 1, %s9
    %p142 = scmp.lt.s32.totalorder %s9, 3
    %p143 = pnand %p141, %p142
    %p144 = pneg %p143
    // Predicated region
    $region9: #{masked_mse_loss.1} parent=5 // pred_check
      _
    $region10: #{masked_mse_loss.1} parent=5 // pred_check_branch
      %146 = sbr.rel (%p143) target = $region12
    $region11: #{masked_mse_loss.1} parent=5 // pred_region
      %s147 = ssub.s32 %s9, 1
    $region12: #{masked_mse_loss.1} parent=5 // pred_fallthru
      _
    %p148 = scmp.lt.s32.totalorder %s9, 2
    // Predicated region
    $region13: #{masked_mse_loss.1} parent=5 // pred_check
      %p149 = pneg %p148
    $region14: #{masked_mse_loss.1} parent=5 // pred_check_branch
      %151 = sbr.rel (%p149) target = $region16
    $region15: #{masked_mse_loss.1} parent=5 // pred_region
      // Predicated region
      $region17: #{masked_mse_loss.1} parent=15 // pred_check
        %p152 = pneg %p43
      $region18: #{masked_mse_loss.1} parent=15 // pred_check_branch
        %154 = sbr.rel (%p152) target = $region20
      $region19: #{masked_mse_loss.1} parent=15 // pred_region
        %p155 = scmp.lt.s32.totalorder %s16, 1
        %s156 = scalar_select %p155, %s16, 1
        %p157 = scmp.lt.s32.totalorder %s17, 0
        %s158 = scalar_select %p157, %s17, 0
        %s159 = smul.addr %s156, 3
        %s160 = sadd.s32 %s158, %s159
        %s161 = smul.addr %s160, 2
        %s162 = scalar_lea.vmem %s0, %s161
      $region20: #{masked_mse_loss.1} parent=15 // pred_fallthru
        _
      // Predicated region
      $region21: #{masked_mse_loss.1} parent=15 // pred_check
        %p163 = pneg %p71
      $region22: #{masked_mse_loss.1} parent=15 // pred_check_branch
        %165 = sbr.rel (%p163) target = $region24
      $region23: #{masked_mse_loss.1} parent=15 // pred_region
        %p166 = scmp.lt.s32.totalorder %s16, 1
        %s167 = scalar_select %p166, %s16, 1
        %p168 = scmp.lt.s32.totalorder %s17, 0
        %s169 = scalar_select %p168, %s17, 0
        %s170 = smul.addr %s167, 3
        %s171 = sadd.s32 %s169, %s170
        %s172 = smul.addr %s171, 2
        %s173 = scalar_lea.vmem %s1, %s172
      $region24: #{masked_mse_loss.1} parent=15 // pred_fallthru
        _
      // Predicated region
      $region25: #{masked_mse_loss.1} parent=15 // pred_check
        %p174 = pneg %p99
      $region26: #{masked_mse_loss.1} parent=15 // pred_check_branch
        %176 = sbr.rel (%p174) target = $region28
      $region27: #{masked_mse_loss.1} parent=15 // pred_region
        %p177 = scmp.lt.s32.totalorder %s16, 1
        %s178 = scalar_select %p177, %s16, 1
        %p179 = scmp.lt.s32.totalorder %s17, 0
        %s180 = scalar_select %p179, %s17, 0
        %s181 = sadd.s32 %s180, %s178
        %s182 = smul.addr %s181, 2
        %s183 = scalar_lea.vmem %s2, %s182
      $region28: #{masked_mse_loss.1} parent=15 // pred_fallthru
        _
    $region16: #{masked_mse_loss.1} parent=5 // pred_fallthru
      _
    %p184 = scmp.le.s32.totalorder 1, %s9
    %p185 = scmp.lt.s32.totalorder %s9, 3
    %p186 = pnand %p184, %p185
    %p187 = pneg %p186
    // Predicated region
    $region29: #{masked_mse_loss.1} parent=5 // pred_check
      _
    $region30: #{masked_mse_loss.1} parent=5 // pred_check_branch
      %189 = sbr.rel (%p186) target = $region32
    $region31: #{masked_mse_loss.1} parent=5 // pred_region
      %s190 = ssub.s32 %s9, 1
      %p191 = scmp.lt.s32.totalorder %s18, 1
      %s192 = scalar_select %p191, %s18, 1
      %p193 = scmp.lt.s32.totalorder %s19, 0
      %s194 = scalar_select %p193, %s19, 0
      %s195 = smul.addr %s192, 3
      %s196 = sadd.s32 %s194, %s195
      %s197 = smul.addr %s196, 2
      %s198 = scalar_lea.vmem %s0, %s197
      %p199 = pneg %p49
      %p200 = pneg %p46
      %p201 = scmp.lt.s32.totalorder %s18, 1
      %s202 = scalar_select %p201, %s18, 1
      %p203 = scmp.lt.s32.totalorder %s19, 0
      %s204 = scalar_select %p203, %s19, 0
      %s205 = smul.addr %s202, 3
      %s206 = sadd.s32 %s204, %s205
      %s207 = smul.addr %s206, 2
      %s208 = scalar_lea.vmem %s1, %s207
      %p209 = pneg %p77
      %p210 = pneg %p74
      %p211 = scmp.lt.s32.totalorder %s18, 1
      %s212 = scalar_select %p211, %s18, 1
      %p213 = scmp.lt.s32.totalorder %s19, 0
      %s214 = scalar_select %p213, %s19, 0
      %s215 = sadd.s32 %s214, %s212
      %s216 = smul.addr %s215, 2
      %s217 = scalar_lea.vmem %s2, %s216
      %p218 = pneg %p105
      %p219 = pneg %p102
      %p220 = pneg %p133
      %p221 = pneg %p130
      %p222 = scmp.lt.s32.totalorder %s18, 1
      %s223 = scalar_select %p222, %s18, 1
      %p224 = scmp.lt.s32.totalorder %s19, 0
      %s225 = scalar_select %p224, %s19, 0
      %s226 = sadd.s32 %s225, %s223
      %s227 = scalar_lea.vmem %s3, %s226
      %p228 = scmp.lt.s32.totalorder %s18, 1
      %s229 = scalar_select %p228, %s18, 1
      %p230 = scmp.lt.s32.totalorder %s19, 0
      %s231 = scalar_select %p230, %s19, 0
      %s232 = smul.addr %s229, 3
      %s233 = sadd.s32 %s231, %s232
      %s234 = smul.addr %s233, 2
      %s235 = scalar_lea.vmem %s0, %s234
      %p236 = scmp.lt.s32.totalorder %s18, 1
      %s237 = scalar_select %p236, %s18, 1
      %p238 = scmp.lt.s32.totalorder %s19, 0
      %s239 = scalar_select %p238, %s19, 0
      %s240 = smul.addr %s237, 3
      %s241 = sadd.s32 %s239, %s240
      %s242 = smul.addr %s241, 2
      %s243 = scalar_lea.vmem %s1, %s242
      %p244 = scmp.lt.s32.totalorder %s18, 1
      %s245 = scalar_select %p244, %s18, 1
      %p246 = scmp.lt.s32.totalorder %s19, 0
      %s247 = scalar_select %p246, %s19, 0
      %s248 = sadd.s32 %s247, %s245
      %s249 = smul.addr %s248, 2
      %s250 = scalar_lea.vmem %s2, %s249
      %p251 = scmp.lt.s32.totalorder %s18, 1
      %s252 = scalar_select %p251, %s18, 1
      %p253 = scmp.lt.s32.totalorder %s19, 0
      %s254 = scalar_select %p253, %s19, 0
      %s255 = sadd.s32 %s254, %s252
      %s256 = scalar_lea.vmem %s3, %s255
      %v257 = vld [vmem:[%s250] sm:$0x3]
      %vm258 = vcmp.ne.s32.totalorder %v257, 0
      %vm259 = vmxor %vm258, 1
      %v260 = vld [vmem:[%s243] sm:$0x3]
      %v261 = vld [vmem:[%s243 + $0x2] sm:$0x3]
      %v262 = vld [vmem:[%s243 + $0x4] sm:$0x3]
      %v263 = vld [vmem:[%s235] sm:$0x3]
      %v264 = vld [vmem:[%s235 + $0x2] sm:$0x3]
      %v265 = vld [vmem:[%s235 + $0x4] sm:$0x3]
      %v266 = vsub.f32 %v260, %v263
      %v267 = vsub.f32 %v261, %v264
      %v268 = vsub.f32 %v262, %v265
      %v269 = vmul.f32 %v266, %v266
      %v270 = vmul.f32 %v267, %v267
      %v271 = vmul.f32 %v268, %v268
      %v272 = vsel %vm259, 1, 0
      %vm273 = vcmp.eq.s32.totalorder %v272, 1
      %v274 = vsel %vm273, %v269, 0.0
      %v275 = vsel %vm273, %v270, 0.0
      %v276 = vsel %vm273, %v271, 0.0
      %vm277 = vcmask 1041408
      %v278 = vsel %vm277, %v274, 0.0
      %v279 = vsel %vm277, %v275, 0.0
      %v280 = vadd.f32 %v278, %v279
      %v281 = vsel %vm277, %v276, 0.0
      %v282 = vadd.f32 %v280, %v281
      %v283 = vsel %vm277, %v282, 0.0
      %v284 = vrot.slane %v283, 4
      %v285 = vadd.f32 %v283, %v284
      %v286 = vrot.slane %v285, 2
      %v287 = vadd.f32 %v285, %v286
      %v288 = vrot.slane %v287, 1
      %v289 = vadd.f32 %v287, %v288
      %290 = vst [vmem:[%s256] sm:$0x1] %v289
      %p291 = scmp.lt.s32.totalorder %s18, 1
      %s292 = scalar_select %p291, %s18, 1
      %p293 = scmp.lt.s32.totalorder %s19, 0
      %s294 = scalar_select %p293, %s19, 0
      %s295 = sadd.s32 %s294, %s292
      %s296 = scalar_lea.vmem %s3, %s295
      // Predicated region
      $region33: #{masked_mse_loss.1} parent=31 // pred_check
        %p297 = pneg %p130
      $region34: #{masked_mse_loss.1} parent=31 // pred_check_branch
        %299 = sbr.rel (%p297) target = $region36
      $region35: #{masked_mse_loss.1} parent=31 // pred_region
        _
      $region36: #{masked_mse_loss.1} parent=31 // pred_fallthru
        _
    $region32: #{masked_mse_loss.1} parent=5 // pred_fallthru
      _
    %p300 = scmp.le.s32.totalorder 2, %s9
    // Predicated region
    $region37: #{masked_mse_loss.1} parent=5 // pred_check
      %p301 = pneg %p300
    $region38: #{masked_mse_loss.1} parent=5 // pred_check_branch
      %303 = sbr.rel (%p301) target = $region40
    $region39: #{masked_mse_loss.1} parent=5 // pred_region
      %s304 = ssub.s32 %s9, 2
      // Predicated region
      $region41: #{masked_mse_loss.1} parent=39 // pred_check
        %p305 = pneg %p136
      $region42: #{masked_mse_loss.1} parent=39 // pred_check_branch
        %307 = sbr.rel (%p305) target = $region44
      $region43: #{masked_mse_loss.1} parent=39 // pred_region
        %p308 = scmp.lt.s32.totalorder %s20, 1
        %s309 = scalar_select %p308, %s20, 1
        %p310 = scmp.lt.s32.totalorder %s21, 0
        %s311 = scalar_select %p310, %s21, 0
        %s312 = sadd.s32 %s311, %s309
        %s313 = scalar_lea.vmem %s3, %s312
      $region44: #{masked_mse_loss.1} parent=39 // pred_fallthru
        _
    $region40: #{masked_mse_loss.1} parent=5 // pred_fallthru
      _
  $region6: #{masked_mse_loss.1} parent=0 // loop_footer
    %s13 = sadd.s32 1, %s9
  $region7: #{masked_mse_loss.1} parent=0 // loop_footer_branch
    %8 = sbr.rel target = $region3
  $region8: #{masked_mse_loss.1} parent=0 // loop_exit
    _

</llo_original>
